<compile_context>
chip_gen: v7x
topology: tpu7x:2x2x1
jax: 0.10.0
libtpu: 0.0.40
codegen_flags: <defaults>
</compile_context>

<pallas_src>
import numpy as np
import jax
import jax.numpy as jnp
from jax.experimental import pallas as pl
from jax.experimental.pallas import tpu as pltpu


# ------------------------------ constants ----------------------------------
_VMEM_LIMIT = 32 * 1024 * 1024          # scoped-VMEM limit requested per call
_VMEM_BLOCK_BUDGET = 16 * 1024 * 1024   # double-buffered in + out blocks
_SMALL_SLAB_BYTES = 2 * 1024 * 1024     # per-block target for batch packing
_MAX_TILE = 1024                        # cap on a transposed-tile edge


def _itemsize(dtype):
    return np.dtype(dtype).itemsize


def _sublane_align(itemsize):
    # f32 -> 8, bf16 -> 16, int8/fp8 -> 32 sublanes per packed row group.
    return max(8, 32 // max(1, itemsize))


def _prod(xs):
    p = 1
    for v in xs:
        p *= int(v)
    return p


# ------------------------------ kernels -------------------------------------
def _transpose_tile_kernel(x_ref, o_ref):
    # (tm, tn) -> (tn, tm) minor-dims (lane) transpose.
    o_ref[...] = x_ref[...].T


def _transpose_batched_kernel(x_ref, o_ref):
    # (bt, M, N) -> (bt, N, M) batched minor-dims transpose.
    o_ref[...] = jnp.swapaxes(x_ref[...], 1, 2)


def _copy_block_kernel(x_ref, o_ref):
    # Pure copy: the permutation lives entirely in the BlockSpec index maps.
    o_ref[...] = x_ref[...]


# ------------------------- tile / grid heuristics ---------------------------
def _dim_candidates(dim, align, max_tile=_MAX_TILE):
    """Legal block sizes for a lane/sublane dim, descending."""
    cands = []
    if dim <= max_tile:
        cands.append(dim)                      # full extent: always legal
    t = (min(max_tile, dim) // align) * align
    while t >= align:
        if t != dim:
            cands.append(t)
        t -= align
    if not cands:
        cands.append(dim)
    return cands


def _pick_tiles(M, N, itemsize):
    """(tm, tn) for an (M, N) -> (N, M) lane transpose.

    tm is the output's lane / contiguous HBM-write dim: biased large.  Both
    tiles are multiples of 128 (or the full dim) so every input/output block
    is lane-dense and sublane-aligned for any dtype, and the double-buffered
    in + out footprint (4 * tm * tn * itemsize) stays within the VMEM budget.
    """
    per_pair = max(128 * 128, _VMEM_BLOCK_BUDGET // (4 * itemsize))
    mc = _dim_candidates(M, 128)
    nc = _dim_candidates(N, 128)
    min_tn = min(N, 256)
    tm = next((t for t in mc if t * min_tn <= per_pair), mc[-1])
    tn = next((t for t in nc if tm * t <= per_pair), nc[-1])
    return tm, tn


def _pick_copy_blocks(D0, F, L, itemsize, align):
    """Block sizes (td0, tF, tL) for the pure-copy (non-lane) transpose."""
    per_block = max(8 * 128, _VMEM_BLOCK_BUDGET // (4 * itemsize))  # elements
    # Lane dim L: take it whole when sane, else a large multiple of 128.
    if L <= per_block:
        tL = L
    else:
        tL = min((L // 128) * 128, max(128, (per_block // 128) * 128), 8 * 1024)
    # Sublane dim F: full if it fits next to tL, else a multiple of `align`.
    rem = max(1, per_block // tL)
    if F <= rem or F <= align:
        tF = F
    else:
        tF = max(align, (rem // align) * align)
    # D0 is a major dim in both views: pack it with the remaining budget so
    # small trailing slabs still produce ~MiB-sized contiguous copies.
    td0 = max(1, min(D0, per_block // max(tF * tL, 1)))
    return td0, tF, tL


def _descending_grid(sizes, index_maps):
    """Order grid axes largest-first (better TensorCore balance on v7x)."""
    order = sorted(range(len(sizes)), key=lambda a: -sizes[a])
    pos = {a: p for p, a in enumerate(order)}
    grid = tuple(sizes[a] for a in order)

    def _wrap(m):
        def wrapped(*g):
            return m(*(g[pos[a]] for a in range(len(sizes))))
        return wrapped

    return grid, [_wrap(m) for m in index_maps]


def _compiler_params(n_axes):
    return pltpu.CompilerParams(
        dimension_semantics=("parallel",) * n_axes,
        vmem_limit_bytes=_VMEM_LIMIT)


def _cost(total_elems, itemsize):
    # Pure memory traffic: one read + one write of every element.
    return pl.CostEstimate(flops=0, transcendentals=0,
                           bytes_accessed=2 * int(total_elems) * itemsize)


# ----------------------- [B, M, N] -> [B, N, M] -----------------------------
def _transpose_last2(xb):
    B, M, N = (int(d) for d in xb.shape)
    isz = _itemsize(xb.dtype)
    slab = M * N * isz

    if slab <= _SMALL_SLAB_BYTES:
        # Tiny per-batch slabs: pack several batch elements per block; cdiv
        # grid handles a ragged last block for any B.
        bt = max(1, min(B, _SMALL_SLAB_BYTES // max(slab, 1)))
        return pl.pallas_call(
            _transpose_batched_kernel,
            out_shape=jax.ShapeDtypeStruct((B, N, M), xb.dtype),
            grid=(pl.cdiv(B, bt),),
            in_specs=[pl.BlockSpec((bt, M, N), lambda b: (b, 0, 0))],
            out_specs=pl.BlockSpec((bt, N, M), lambda b: (b, 0, 0)),
            compiler_params=_compiler_params(1),
            cost_estimate=_cost(B * M * N, isz),
        )(xb)

    tm, tn = _pick_tiles(M, N, isz)
    sizes = (B, pl.cdiv(M, tm), pl.cdiv(N, tn))
    grid, (in_map, out_map) = _descending_grid(
        sizes,
        [lambda b, i, j: (b, i, j),
         lambda b, i, j: (b, j, i)])
    return pl.pallas_call(
        _transpose_tile_kernel,
        out_shape=jax.ShapeDtypeStruct((B, N, M), xb.dtype),
        grid=grid,
        in_specs=[pl.BlockSpec((None, tm, tn), in_map)],
        out_specs=pl.BlockSpec((None, tn, tm), out_map),
        compiler_params=_compiler_params(len(grid)),
        cost_estimate=_cost(B * M * N, isz),
    )(xb)


# ---------------- d1 == last axis, d0 < ndim - 2 -----------------------------
def _transpose_dim_with_last(x, d0):
    shape = x.shape
    ndim = x.ndim
    A = _prod(shape[:d0])
    D0 = int(shape[d0])
    C = _prod(shape[d0 + 1:ndim - 1])
    N = int(shape[-1])
    isz = _itemsize(x.dtype)

    x4 = x.reshape(A, D0, C, N)
    td0, tn = _pick_tiles(D0, N, isz)
    sizes = (A * C, pl.cdiv(D0, td0), pl.cdiv(N, tn))
    grid, (in_map, out_map) = _descending_grid(
        sizes,
        [lambda g, i, j: (g // C, i, g % C, j),
         lambda g, i, j: (g // C, j, g % C, i)])
    y4 = pl.pallas_call(
        _transpose_tile_kernel,
        out_shape=jax.ShapeDtypeStruct((A, N, C, D0), x.dtype),
        grid=grid,
        in_specs=[pl.BlockSpec((None, td0, None, tn), in_map)],
        out_specs=pl.BlockSpec((None, tn, None, td0), out_map),
        compiler_params=_compiler_params(len(grid)),
        cost_estimate=_cost(A * D0 * C * N, isz),
    )(x4)

    out_shape = list(shape)
    out_shape[d0], out_shape[-1] = shape[-1], shape[d0]
    return y4.reshape(out_shape)


# ----------------- neither swapped dim is the last axis ----------------------
def _transpose_non_lane(x, d0, d1):
    shape = x.shape
    A = _prod(shape[:d0])
    D0 = int(shape[d0])
    C = _prod(shape[d0 + 1:d1])
    D1 = int(shape[d1])
    F = _prod(shape[d1 + 1:-1])
    L = int(shape[-1])
    isz = _itemsize(x.dtype)
    align = _sublane_align(isz)

    td0, tF, tL = _pick_copy_blocks(D0, F, L, isz, align)
    nL = pl.cdiv(L, tL)
    nF = pl.cdiv(F, tF)
    x6 = x.reshape(A, D0, C, D1, F, L)

    sizes = (A * C, D1, pl.cdiv(D0, td0), nF * nL)
    grid, (in_map, out_map) = _descending_grid(
        sizes,
        [lambda g, j, i, fl: (g // C, i, g % C, j, fl // nL, fl % nL),
         lambda g, j, i, fl: (g // C, j, g % C, i, fl // nL, fl % nL)])
    y6 = pl.pallas_call(
        _copy_block_kernel,
        out_shape=jax.ShapeDtypeStruct((A, D1, C, D0, F, L), x.dtype),
        grid=grid,
        in_specs=[pl.BlockSpec((None, td0, None, None, tF, tL), in_map)],
        out_specs=pl.BlockSpec((None, None, None, td0, tF, tL), out_map),
        compiler_params=_compiler_params(len(grid)),
        cost_estimate=_cost(A * D0 * C * D1 * F * L, isz),
    )(x6)

    out_shape = list(shape)
    out_shape[d0], out_shape[d1] = shape[d1], shape[d0]
    return y6.reshape(out_shape)


# ------------------------------ module wrapper -------------------------------
class Transpose:
    """JAX/Pallas equivalent of the torch.nn-style Transpose(dims) module."""

    def __init__(self, dims):
        assert len(dims) == 2, 'dims must be a tuple of two dimensions'
        self.dims = dims

    def __call__(self, x):
        ndim = x.ndim
        d0, d1 = (d % ndim for d in self.dims)
        if d0 == d1:
            return x
        d0, d1 = sorted((d0, d1))

        if d1 == ndim - 1:
            if d0 == ndim - 2:
                # Trailing-axes swap.
                lead = x.shape[:-2]
                B = _prod(lead)
                M, N = int(x.shape[-2]), int(x.shape[-1])
                yb = _transpose_last2(x.reshape(B, M, N))
                return yb.reshape(*lead, N, M)
            # d0 non-adjacent to the last axis: single-pass strided lane transpose.
            return _transpose_dim_with_last(x, d0)

        # Neither swapped dim is the last axis: pure address-remapping copy.
        return _transpose_non_lane(x, d0, d1)


if __name__ == "__main__":
    # Case 1: trailing-axes transpose, tiny slabs -> batch-packed kernel path.
    x1 = jax.random.normal(jax.random.PRNGKey(0), (2, 8, 32), dtype=jnp.float32)
    y1 = jax.block_until_ready(Transpose((1, 2))(x1))
    np.testing.assert_array_equal(np.asarray(y1), np.asarray(jnp.swapaxes(x1, 1, 2)))

    # Case 2: d1 == last axis, d0 non-adjacent -> single-pass strided lane transpose
    # (previously needed two extra jnp.moveaxis HBM passes).
    x2 = jax.random.normal(jax.random.PRNGKey(1), (2, 4, 16, 16), dtype=jnp.float32)
    y2 = jax.block_until_ready(Transpose((1, 3))(x2))
    np.testing.assert_array_equal(np.asarray(y2), np.asarray(jnp.swapaxes(x2, 1, 3)))

    # Case 3: larger trailing transpose -> byte-budgeted tiled path with a big
    # tm (1024) and a ragged edge tile along M.
    x3 = jax.random.normal(jax.random.PRNGKey(2), (1, 1280, 768), dtype=jnp.float32)
    y3 = jax.block_until_ready(Transpose((1, 2))(x3))
    np.testing.assert_array_equal(np.asarray(y3), np.asarray(jnp.swapaxes(x3, 1, 2)))

    # Case 4: neither swapped dim is the last axis -> pure-copy remap kernel.
    x4 = jax.random.normal(jax.random.PRNGKey(3), (2, 4, 8, 16, 32), dtype=jnp.float32)
    y4 = jax.block_until_ready(Transpose((1, 2))(x4))
    np.testing.assert_array_equal(np.asarray(y4), np.asarray(jnp.swapaxes(x4, 1, 2)))

    # Case 5: odd batch with moderate slabs -> cdiv batch packing (bt=4 over B=5,
    # ragged last block).
    x5 = jax.random.normal(jax.random.PRNGKey(4), (5, 256, 512), dtype=jnp.float32)
    y5 = jax.block_until_ready(Transpose((-2, -1))(x5))
    np.testing.assert_array_equal(np.asarray(y5), np.asarray(jnp.swapaxes(x5, -2, -1)))

    # Case 6: bf16 trailing transpose (packed dtype, full-extent blocks).
    x6 = jax.random.normal(jax.random.PRNGKey(5), (2, 8, 32), dtype=jnp.bfloat16)
    y6 = jax.block_until_ready(Transpose((1, 2))(x6))
    np.testing.assert_array_equal(
        np.asarray(y6.astype(jnp.float32)),
        np.asarray(jnp.swapaxes(x6, 1, 2).astype(jnp.float32)))

    print("KERNEL_OK")
</pallas_src>

<mosaic_0001>
module attributes {stable_mosaic.version = 11 : i64} {
  func.func @_transpose_batched_kernel(%arg0: i32, %arg1: memref<2x8x32xf32, #tpu.memory_space<vmem>>, %arg2: memref<2x32x8xf32, #tpu.memory_space<vmem>>) attributes {dimension_semantics = [#tpu.dimension_semantics<parallel>], iteration_bounds = array<i64: 1>, scalar_prefetch = 0 : i64, scratch_operands = 0 : i64, tpu.core_type = #tpu.core_type<tc>, window_params = [{transform_indices = @transform_0, window_bounds = array<i64: 2, 8, 32>}, {transform_indices = @transform_1, window_bounds = array<i64: 2, 32, 8>}]} {
    %c0 = arith.constant 0 : index
    %c0_0 = arith.constant 0 : index
    %c0_1 = arith.constant 0 : index
    %0 = vector.load %arg1[%c0, %c0_0, %c0_1] : memref<2x8x32xf32, #tpu.memory_space<vmem>>, vector<2x8x32xf32>
    %1 = tpu.transpose %0, [0, 2, 1] : vector<2x8x32xf32> -> vector<2x32x8xf32>
    %c0_2 = arith.constant 0 : index
    %c0_3 = arith.constant 0 : index
    %c0_4 = arith.constant 0 : index
    %2 = vector.load %arg2[%c0_2, %c0_3, %c0_4] : memref<2x32x8xf32, #tpu.memory_space<vmem>>, vector<2x32x8xf32>
    tpu.vector_store %arg2[%c0_2, %c0_3, %c0_4], %1 {strides = array<i32>} : memref<2x32x8xf32, #tpu.memory_space<vmem>>, vector<2x32x8xf32>,
    return
  }
  func.func @transform_0(%arg0: i32) -> (i32, i32, i32) {
    %c0_i32 = arith.constant 0 : i32
    %c0_i32_0 = arith.constant 0 : i32
    %c0_i32_1 = arith.constant 0 : i32
    return %arg0, %c0_i32, %c0_i32_0 : i32, i32, i32
  }
  func.func @transform_1(%arg0: i32) -> (i32, i32, i32) {
    %c0_i32 = arith.constant 0 : i32
    %c0_i32_0 = arith.constant 0 : i32
    %c0_i32_1 = arith.constant 0 : i32
    return %arg0, %c0_i32, %c0_i32_0 : i32, i32, i32
  }
}

</mosaic_0001>

<llo_original>
// kernel: tpu_custom_call.1
$region0: #{tpu_custom_call.1}
  #allocation0 [shape = 'u32[]', space=smem, size = 0x4, offset = 0x4, fixed_abs, tag = 'smem constant byte address 0x4 - core index']
  #allocation1 [shape = 'u32[144,128]{1,0:T(1,128)}', space=vmem, size = 0x12000, scoped, tag = 'internal scratch']
  %s0 = inlined_call_operand.hbm [shape: f32[2,8,32], index: 0, kind: input, shape index: {}]
  %s1 = inlined_call_operand.vmem [shape: f32[2,32,8], index: 1, kind: output, shape index: {}]
  %s2 = sld [smem:[#allocation0]]
  $region18: #{tpu_custom_call.1} parent=0
    _
  %s4 = ssub.s32 1, %s2
  %s5 = scalar_select 0, %s4, %s2
  $region1: #{tpu_custom_call.1} parent=0
    #allocation2 [shape = 'u8[8192]{0}', space=vmem, size = 0x2000, scoped, tag = 'input window, operand 0, single buffered']
    #allocation3 [shape = 's32[1]{0}', space=sflag, size = 0x4, scoped, tag = 'scoped memory for tpu_custom_call.1']
    %6 = vsyncpa [#allocation3], 0
    // Predicated region
    $region2: #{tpu_custom_call.1} parent=1 // pred_check
      _
    $region3: #{tpu_custom_call.1} parent=1 // pred_check_branch
      %8 = sbr.rel (0) target = $region5
    $region4: #{tpu_custom_call.1} parent=1 // pred_region
      %s10 = ssub.s32 256, 256
      %11 = vsyncadd [#allocation3], %s10
      %s12 = sshll.u32 [#allocation2], 4
      %s13 = int_to_ptr.vmem [resolvable:$true] %s12
      %18 = dma.hbm_to_vmem [thread:$0]  %s0, 256, %s13, [#allocation3], 128, 128, 8
    $region5: #{tpu_custom_call.1} parent=1 // pred_fallthru
      _
    // Predicated region
    $region6: #{tpu_custom_call.1} parent=1 // pred_check
      _
    $region7: #{tpu_custom_call.1} parent=1 // pred_check_branch
      %20 = sbr.rel (0) target = $region9
    $region8: #{tpu_custom_call.1} parent=1 // pred_region
      %21 = dma.done [#allocation3], 256
    $region9: #{tpu_custom_call.1} parent=1 // pred_fallthru
      _
    %v22 = vld [vmem:[#allocation2] sm:$0xff]
    %v23 = vld [vmem:[#allocation2 + $0x8] sm:$0xff]
    %24 = vxpose.xlu0.b32.start [1/16] %v22, 128
    %25 = vxpose.xlu0.b32.cont [2/16] 0.0, 128
    %26 = vxpose.xlu0.b32.cont [3/16] 0.0, 128
    %27 = vxpose.xlu0.b32.cont [4/16] 0.0, 128
    %28 = vxpose.xlu0.b32.cont [5/16] 0.0, 128
    %29 = vxpose.xlu0.b32.cont [6/16] 0.0, 128
    %30 = vxpose.xlu0.b32.cont [7/16] 0.0, 128
    %31 = vxpose.xlu0.b32.cont [8/16] 0.0, 128
    %32 = vxpose.xlu0.b32.cont [9/16] 0.0, 128
    %33 = vxpose.xlu0.b32.cont [10/16] 0.0, 128
    %34 = vxpose.xlu0.b32.cont [11/16] 0.0, 128
    %35 = vxpose.xlu0.b32.cont [12/16] 0.0, 128
    %36 = vxpose.xlu0.b32.cont [13/16] 0.0, 128
    %37 = vxpose.xlu0.b32.cont [14/16] 0.0, 128
    %38 = vxpose.xlu0.b32.cont [15/16] 0.0, 128
    %39 = vxpose.xlu0.b32.end [16/16] 0.0, 128
    %v40 = vpop.trf.xlu0
    %v41 = vpop.trf.xlu0
    %v42 = vpop.trf.xlu0
    %v43 = vpop.trf.xlu0
    %v44 = vpop.trf.xlu0
    %v45 = vpop.trf.xlu0
    %v46 = vpop.trf.xlu0
    %v47 = vpop.trf.xlu0
    %v48 = vpop.trf.xlu0
    %v49 = vpop.trf.xlu0
    %v50 = vpop.trf.xlu0
    %v51 = vpop.trf.xlu0
    %v52 = vpop.trf.xlu0
    %v53 = vpop.trf.xlu0
    %v54 = vpop.trf.xlu0
    %v55 = vpop.trf.xlu0
    %56 = vxpose.xlu0.b32.start [1/16] %v23, 128
    %57 = vxpose.xlu0.b32.cont [2/16] 0.0, 128
    %58 = vxpose.xlu0.b32.cont [3/16] 0.0, 128
    %59 = vxpose.xlu0.b32.cont [4/16] 0.0, 128
    %60 = vxpose.xlu0.b32.cont [5/16] 0.0, 128
    %61 = vxpose.xlu0.b32.cont [6/16] 0.0, 128
    %62 = vxpose.xlu0.b32.cont [7/16] 0.0, 128
    %63 = vxpose.xlu0.b32.cont [8/16] 0.0, 128
    %64 = vxpose.xlu0.b32.cont [9/16] 0.0, 128
    %65 = vxpose.xlu0.b32.cont [10/16] 0.0, 128
    %66 = vxpose.xlu0.b32.cont [11/16] 0.0, 128
    %67 = vxpose.xlu0.b32.cont [12/16] 0.0, 128
    %68 = vxpose.xlu0.b32.cont [13/16] 0.0, 128
    %69 = vxpose.xlu0.b32.cont [14/16] 0.0, 128
    %70 = vxpose.xlu0.b32.cont [15/16] 0.0, 128
    %71 = vxpose.xlu0.b32.end [16/16] 0.0, 128
    %v72 = vpop.trf.xlu0
    %v73 = vpop.trf.xlu0
    %v74 = vpop.trf.xlu0
    %v75 = vpop.trf.xlu0
    %v76 = vpop.trf.xlu0
    %v77 = vpop.trf.xlu0
    %v78 = vpop.trf.xlu0
    %v79 = vpop.trf.xlu0
    %v80 = vpop.trf.xlu0
    %v81 = vpop.trf.xlu0
    %v82 = vpop.trf.xlu0
    %v83 = vpop.trf.xlu0
    %v84 = vpop.trf.xlu0
    %v85 = vpop.trf.xlu0
    %v86 = vpop.trf.xlu0
    %v87 = vpop.trf.xlu0
    %vm88 = vcmask 64512
    %89 = vst.msk [vmem:[%s1] sm:$0xff] %vm88, %v40
    %90 = vst.msk [vmem:[%s1 + $0x8] sm:$0xff] %vm88, %v41
    %91 = vst.msk [vmem:[%s1 + $0x10] sm:$0xff] %vm88, %v42
    %92 = vst.msk [vmem:[%s1 + $0x18] sm:$0xff] %vm88, %v43
    %93 = vst.msk [vmem:[%s1 + $0x20] sm:$0xff] %vm88, %v72
    %94 = vst.msk [vmem:[%s1 + $0x28] sm:$0xff] %vm88, %v73
    %95 = vst.msk [vmem:[%s1 + $0x30] sm:$0xff] %vm88, %v74
    %96 = vst.msk [vmem:[%s1 + $0x38] sm:$0xff] %vm88, %v75
    // Predicated region
    $region10: #{tpu_custom_call.1} parent=1 // pred_check
      _
    $region11: #{tpu_custom_call.1} parent=1 // pred_check_branch
      %98 = sbr.rel (0) target = $region13
    $region12: #{tpu_custom_call.1} parent=1 // pred_region
      _
    $region13: #{tpu_custom_call.1} parent=1 // pred_fallthru
      _
    // Predicated region
    $region14: #{tpu_custom_call.1} parent=1 // pred_check
      _
    $region15: #{tpu_custom_call.1} parent=1 // pred_check_branch
      %100 = sbr.rel (0) target = $region17
    $region16: #{tpu_custom_call.1} parent=1 // pred_region
      _
    $region17: #{tpu_custom_call.1} parent=1 // pred_fallthru
      _
    %101 = vsyncpa [#allocation3], 1

</llo_original>
